<compile_context>
chip_gen: v7x
topology: tpu7x:2x2x1
jax: 0.10.0
libtpu: 0.0.40
codegen_flags: <defaults>
</compile_context>

<pallas_src>
import math

import jax
import jax.numpy as jnp
from jax.experimental import pallas as pl
from jax.experimental.pallas import tpu as pltpu


# Fused temporal-table layout: rows [hour | weekday | day | month | zero pad].
HOUR_SIZE, WEEKDAY_SIZE, DAY_SIZE, MONTH_SIZE = 24, 7, 32, 13
HOUR_OFF = 0
WDAY_OFF = HOUR_OFF + HOUR_SIZE          # 24
DAY_OFF = WDAY_OFF + WEEKDAY_SIZE        # 31
MON_OFF = DAY_OFF + DAY_SIZE             # 63
TABLE_ROWS = 128                         # lane-dense padded height (>= 76)


def data_embedding_kernel(x_ref, mark_ref, w_ref, o_ref):
    bt, L, c_in = x_ref.shape
    n_table = w_ref.shape[0] - 3 * c_in          # padded temporal rows (=128)

    w = w_ref[...]                               # (3*c_in + n_table, d_model)
    lane = jax.lax.broadcasted_iota(jnp.int32, (L, n_table), 1)

    for b in range(bt):                          # bt is a small static block dim
        x = x_ref[b]                             # (L, c_in) f32
        # Circular k=3 conv taps via in-VMEM circular shifts (no padded HBM copy).
        x_prev = jnp.roll(x, 1, axis=0)          # row l -> x[(l-1) mod L]
        x_next = jnp.roll(x, -1, axis=0)         # row l -> x[(l+1) mod L]

        m = mark_ref[b]                          # (L, n_marks) int32
        # One multi-hot over the fused [hour|weekday|day|month|pad] table.
        # Ranges are disjoint, so OR of the four one-hots is exact.
        multihot = ((lane == m[:, 3:4] + HOUR_OFF)      # hour_embed(x[:,:,3])
                    | (lane == m[:, 2:3] + WDAY_OFF)    # weekday_embed(x[:,:,2])
                    | (lane == m[:, 1:2] + DAY_OFF)     # day_embed(x[:,:,1])
                    | (lane == m[:, 0:1] + MON_OFF)     # month_embed(x[:,:,0])
                    ).astype(jnp.float32)               # (L, 128)

        # Single fused matmul: conv taps + temporal lookups in one MXU pass.
        xin = jnp.concatenate([x_prev, x, x_next, multihot], axis=1)
        o_ref[b] = jnp.dot(xin, w,
                           preferred_element_type=jnp.float32).astype(o_ref.dtype)


def build_fused_weight(conv_w, hour_t, wday_t, day_t, mon_t):
    """Stack the 3 conv taps and the 4 temporal tables into one constant."""
    d_model = conv_w.shape[0]
    w_taps = jnp.concatenate(
        [conv_w[:, :, 0].T, conv_w[:, :, 1].T, conv_w[:, :, 2].T], axis=0)
    table = jnp.concatenate([hour_t, wday_t, day_t, mon_t], axis=0)   # (76, d)
    assert table.shape[0] <= TABLE_ROWS
    table = jnp.pad(table, ((0, TABLE_ROWS - table.shape[0]), (0, 0)))
    return jnp.concatenate([w_taps, table], axis=0).astype(jnp.float32)
    # shape: (3*c_in + 128, d_model)


def _default_batch_block(B, L, d_model):
    if B <= 2:
        return 1
    bt = B // 2                                   # keep >=2 grid steps (megacore)
    cap = max(1, (2 << 20) // max(1, L * d_model * 4))   # ~2 MiB output block
    bt = max(1, min(bt, cap))
    while B % bt:
        bt -= 1
    return bt


def data_embedding_wo_pos(x, x_mark, conv_w, hour_t, wday_t, day_t, mon_t,
                          *, batch_block=None):
    B, L, c_in = x.shape
    d_model = conv_w.shape[0]
    n_marks = x_mark.shape[-1]

    w_full = build_fused_weight(conv_w, hour_t, wday_t, day_t, mon_t)
    k_full = w_full.shape[0]

    bt = _default_batch_block(B, L, d_model) if batch_block is None else batch_block
    assert B % bt == 0, "batch_block must divide batch"

    return pl.pallas_call(
        data_embedding_kernel,
        out_shape=jax.ShapeDtypeStruct((B, L, d_model), jnp.float32),
        grid=(B // bt,),
        in_specs=[
            pl.BlockSpec((bt, L, c_in), lambda i: (i, 0, 0)),
            pl.BlockSpec((bt, L, n_marks), lambda i: (i, 0, 0)),
            pl.BlockSpec((k_full, d_model), lambda i: (0, 0)),
        ],
        out_specs=pl.BlockSpec((bt, L, d_model), lambda i: (i, 0, 0)),
        compiler_params=pltpu.CompilerParams(dimension_semantics=("parallel",)),
    )(x, x_mark, w_full)


def fixed_embedding_table(c_in, d_model):
    """Sinusoidal table identical to FixedEmbedding's buffer."""
    position = jnp.arange(c_in, dtype=jnp.float32)[:, None]
    div_term = jnp.exp(jnp.arange(0, d_model, 2, dtype=jnp.float32)
                       * -(math.log(10000.0) / d_model))
    ang = position * div_term
    w = jnp.zeros((c_in, d_model), jnp.float32)
    w = w.at[:, 0::2].set(jnp.sin(ang))
    w = w.at[:, 1::2].set(jnp.cos(ang))
    return w


def ref_forward(x, x_mark, conv_w, hour_t, wday_t, day_t, mon_t):
    """Pure-JAX reference of the forward pass (eval-mode dropout)."""
    B, L, c_in = x.shape
    xp = jnp.concatenate([x[:, -1:, :], x, x[:, :1, :]], axis=1)
    w0, w1, w2 = conv_w[:, :, 0].T, conv_w[:, :, 1].T, conv_w[:, :, 2].T
    val = xp[:, 0:L] @ w0 + xp[:, 1:L + 1] @ w1 + xp[:, 2:L + 2] @ w2
    temp = (hour_t[x_mark[:, :, 3]] + wday_t[x_mark[:, :, 2]]
            + day_t[x_mark[:, :, 1]] + mon_t[x_mark[:, :, 0]])
    return val + temp


def _make_inputs(key, B, L, c_in, d_model):
    kx, kw, k_mon, k_day, k_wd, k_hr, k_min = jax.random.split(key, 7)
    x = jax.random.normal(kx, (B, L, c_in), dtype=jnp.float32)
    x_mark = jnp.stack([
        jax.random.randint(k_mon, (B, L), 0, MONTH_SIZE),
        jax.random.randint(k_day, (B, L), 0, DAY_SIZE),
        jax.random.randint(k_wd, (B, L), 0, WEEKDAY_SIZE),
        jax.random.randint(k_hr, (B, L), 0, HOUR_SIZE),
        jax.random.randint(k_min, (B, L), 0, 4),     # minute, unused for freq='h'
    ], axis=-1).astype(jnp.int32)
    fan_in = c_in * 3
    std = math.sqrt(2.0) / math.sqrt(fan_in)         # kaiming_normal, leaky_relu
    conv_w = std * jax.random.normal(kw, (d_model, c_in, 3), dtype=jnp.float32)
    hour_t = fixed_embedding_table(HOUR_SIZE, d_model)
    wday_t = fixed_embedding_table(WEEKDAY_SIZE, d_model)
    day_t = fixed_embedding_table(DAY_SIZE, d_model)
    mon_t = fixed_embedding_table(MONTH_SIZE, d_model)
    return x, x_mark, conv_w, hour_t, wday_t, day_t, mon_t


if __name__ == "__main__":
    key = jax.random.PRNGKey(0)
    k1, k2 = jax.random.split(key)

    # Small test: B=2, L=8, c_in=4, d_model=32 (grid=(2,), one batch per step).
    args = _make_inputs(k1, B=2, L=8, c_in=4, d_model=32)
    out = jax.block_until_ready(data_embedding_wo_pos(*args))
    ref = ref_forward(*args)
    assert out.shape == (2, 8, 32)
    assert jnp.allclose(out, ref, atol=1e-5, rtol=1e-5), "mismatch vs JAX reference"

    # Batched-block path: B=4 folded as 2 batch elements per grid step.
    args2 = _make_inputs(k2, B=4, L=16, c_in=5, d_model=64)
    out2 = jax.block_until_ready(data_embedding_wo_pos(*args2, batch_block=2))
    ref2 = ref_forward(*args2)
    assert out2.shape == (4, 16, 64)
    assert jnp.allclose(out2, ref2, atol=1e-5, rtol=1e-5), "mismatch (batched block)"

    print("KERNEL_OK")
</pallas_src>

<mosaic_0001>
module attributes {stable_mosaic.version = 11 : i64} {
  func.func @data_embedding_kernel(%arg0: i32, %arg1: memref<1x8x4xf32, #tpu.memory_space<vmem>>, %arg2: memref<1x8x5xi32, #tpu.memory_space<vmem>>, %arg3: memref<140x32xf32, #tpu.memory_space<vmem>>, %arg4: memref<1x8x32xf32, #tpu.memory_space<vmem>>) attributes {dimension_semantics = [#tpu.dimension_semantics<parallel>], iteration_bounds = array<i64: 2>, scalar_prefetch = 0 : i64, scratch_operands = 0 : i64, tpu.core_type = #tpu.core_type<tc>, window_params = [{transform_indices = @transform_0, window_bounds = array<i64: 1, 8, 4>}, {transform_indices = @transform_1, window_bounds = array<i64: 1, 8, 5>}, {pipeline_mode = #tpu.pipeline_mode<synchronous>, transform_indices = @transform_2, window_bounds = array<i64: 140, 32>}, {transform_indices = @transform_3, window_bounds = array<i64: 1, 8, 32>}]} {
    %c0 = arith.constant 0 : index
    %c0_0 = arith.constant 0 : index
    %0 = vector.load %arg3[%c0, %c0_0] : memref<140x32xf32, #tpu.memory_space<vmem>>, vector<140x32xf32>
    %1 = tpu.iota {dimensions = array<i32: 1>} : vector<8x128xi32>
    %c0_1 = arith.constant 0 : index
    %c0_2 = arith.constant 0 : index
    %c0_3 = arith.constant 0 : index
    %2 = vector.load %arg1[%c0_1, %c0_2, %c0_3] : memref<1x8x4xf32, #tpu.memory_space<vmem>>, vector<1x8x4xf32>
    %3 = vector.shape_cast %2 : vector<1x8x4xf32> to vector<8x4xf32>
    %4 = vector.extract_strided_slice %3 {offsets = [7, 0], sizes = [1, 4], strides = [1, 1]} : vector<8x4xf32> to vector<1x4xf32>
    %5 = vector.extract_strided_slice %3 {offsets = [0, 0], sizes = [7, 4], strides = [1, 1]} : vector<8x4xf32> to vector<7x4xf32>
    %6 = tpu.concatenate %4, %5 in 0 : vector<1x4xf32>, vector<7x4xf32> -> vector<8x4xf32>
    %7 = vector.extract_strided_slice %3 {offsets = [1, 0], sizes = [7, 4], strides = [1, 1]} : vector<8x4xf32> to vector<7x4xf32>
    %8 = vector.extract_strided_slice %3 {offsets = [0, 0], sizes = [1, 4], strides = [1, 1]} : vector<8x4xf32> to vector<1x4xf32>
    %9 = tpu.concatenate %7, %8 in 0 : vector<7x4xf32>, vector<1x4xf32> -> vector<8x4xf32>
    %c0_4 = arith.constant 0 : index
    %c0_5 = arith.constant 0 : index
    %c0_6 = arith.constant 0 : index
    %10 = vector.load %arg2[%c0_4, %c0_5, %c0_6] : memref<1x8x5xi32, #tpu.memory_space<vmem>>, vector<1x8x5xi32>
    %11 = vector.shape_cast %10 : vector<1x8x5xi32> to vector<8x5xi32>
    %12 = vector.extract_strided_slice %11 {offsets = [0, 3], sizes = [8, 1], strides = [1, 1]} : vector<8x5xi32> to vector<8x1xi32>
    %c0_i32 = arith.constant 0 : i32
    %13 = vector.broadcast %c0_i32 : i32 to vector<8x1xi32>
    %14 = arith.addi %12, %13 : vector<8x1xi32>
    %15 = vector.broadcast %14 : vector<8x1xi32> to vector<8x128xi32>
    %16 = arith.cmpi eq, %1, %15 : vector<8x128xi32>
    %17 = vector.extract_strided_slice %11 {offsets = [0, 2], sizes = [8, 1], strides = [1, 1]} : vector<8x5xi32> to vector<8x1xi32>
    %c24_i32 = arith.constant 24 : i32
    %18 = vector.broadcast %c24_i32 : i32 to vector<8x1xi32>
    %19 = arith.addi %17, %18 : vector<8x1xi32>
    %20 = vector.broadcast %19 : vector<8x1xi32> to vector<8x128xi32>
    %21 = arith.cmpi eq, %1, %20 : vector<8x128xi32>
    %22 = arith.ori %16, %21 : vector<8x128xi1>
    %23 = vector.extract_strided_slice %11 {offsets = [0, 1], sizes = [8, 1], strides = [1, 1]} : vector<8x5xi32> to vector<8x1xi32>
    %c31_i32 = arith.constant 31 : i32
    %24 = vector.broadcast %c31_i32 : i32 to vector<8x1xi32>
    %25 = arith.addi %23, %24 : vector<8x1xi32>
    %26 = vector.broadcast %25 : vector<8x1xi32> to vector<8x128xi32>
    %27 = arith.cmpi eq, %1, %26 : vector<8x128xi32>
    %28 = arith.ori %22, %27 : vector<8x128xi1>
    %29 = vector.extract_strided_slice %11 {offsets = [0, 0], sizes = [8, 1], strides = [1, 1]} : vector<8x5xi32> to vector<8x1xi32>
    %c63_i32 = arith.constant 63 : i32
    %30 = vector.broadcast %c63_i32 : i32 to vector<8x1xi32>
    %31 = arith.addi %29, %30 : vector<8x1xi32>
    %32 = vector.broadcast %31 : vector<8x1xi32> to vector<8x128xi32>
    %33 = arith.cmpi eq, %1, %32 : vector<8x128xi32>
    %34 = arith.ori %28, %33 : vector<8x128xi1>
    %35 = arith.extui %34 : vector<8x128xi1> to vector<8x128xi32>
    %36 = arith.sitofp %35 : vector<8x128xi32> to vector<8x128xf32>
    %37 = tpu.concatenate %6, %3, %9, %36 in 1 : vector<8x4xf32>, vector<8x4xf32>, vector<8x4xf32>, vector<8x128xf32> -> vector<8x140xf32>
    %cst = arith.constant dense<0.000000e+00> : vector<8x32xf32>
    %38 = tpu.matmul %37, %0, %cst {dimension_numbers = #tpu.dot_dimension_numbers<[1], [0], [0], [1], [0, 0, 1, 1], [], []>} : vector<8x140xf32>, vector<140x32xf32>, vector<8x32xf32> -> vector<8x32xf32>
    %c0_7 = arith.constant 0 : index
    %c0_8 = arith.constant 0 : index
    %c0_9 = arith.constant 0 : index
    %39 = vector.load %arg4[%c0_7, %c0_8, %c0_9] : memref<1x8x32xf32, #tpu.memory_space<vmem>>, vector<1x8x32xf32>
    %40 = vector.shape_cast %39 : vector<1x8x32xf32> to vector<8x32xf32>
    %41 = vector.shape_cast %38 : vector<8x32xf32> to vector<1x8x32xf32>
    tpu.vector_store %arg4[%c0_7, %c0_8, %c0_9], %41 {strides = array<i32>} : memref<1x8x32xf32, #tpu.memory_space<vmem>>, vector<1x8x32xf32>,
    return
  }
  func.func @transform_0(%arg0: i32) -> (i32, i32, i32) {
    %c0_i32 = arith.constant 0 : i32
    %c0_i32_0 = arith.constant 0 : i32
    %c0_i32_1 = arith.constant 0 : i32
    return %arg0, %c0_i32, %c0_i32_0 : i32, i32, i32
  }
  func.func @transform_1(%arg0: i32) -> (i32, i32, i32) {
    %c0_i32 = arith.constant 0 : i32
    %c0_i32_0 = arith.constant 0 : i32
    %c0_i32_1 = arith.constant 0 : i32
    return %arg0, %c0_i32, %c0_i32_0 : i32, i32, i32
  }
  func.func @transform_2(%arg0: i32) -> (i32, i32) {
    %c0_i32 = arith.constant 0 : i32
    %c0_i32_0 = arith.constant 0 : i32
    %c0_i32_1 = arith.constant 0 : i32
    return %c0_i32, %c0_i32_0 : i32, i32
  }
  func.func @transform_3(%arg0: i32) -> (i32, i32, i32) {
    %c0_i32 = arith.constant 0 : i32
    %c0_i32_0 = arith.constant 0 : i32
    %c0_i32_1 = arith.constant 0 : i32
    return %arg0, %c0_i32, %c0_i32_0 : i32, i32, i32
  }
}

</mosaic_0001>

<llo_original>
// kernel: tpu_custom_call.1
$region0: #{tpu_custom_call.1}
  #allocation0 [shape = 'u32[]', space=smem, size = 0x4, offset = 0x4, fixed_abs, tag = 'smem constant byte address 0x4 - core index']
  #allocation1 [shape = 'u32[144,128]{1,0:T(1,128)}', space=vmem, size = 0x12000, scoped, tag = 'internal scratch']
  %s0 = inlined_call_operand.vmem [shape: f32[2,8,4], index: 0, kind: input, shape index: {}]
  %s1 = inlined_call_operand.vmem [shape: s32[2,8,5], index: 1, kind: input, shape index: {}]
  %s2 = inlined_call_operand.vmem [shape: f32[140,32], index: 2, kind: input, shape index: {}]
  %s3 = inlined_call_operand.hbm [shape: f32[2,8,32], index: 3, kind: output, shape index: {}]
  %s4 = sld [smem:[#allocation0]]
  $region45: #{tpu_custom_call.1} parent=0
    _
  %s6 = ssub.s32 1, %s4
  %s7 = scalar_select 0, %s6, %s4
  $region1: #{tpu_custom_call.1} parent=0
    #allocation2 [shape = 'u8[8192]{0}', space=vmem, size = 0x2000, scoped, tag = 'output window, operand 0']
    #allocation3 [shape = 's32[2]{0}', space=sflag, size = 0x8, scoped, tag = 'scoped memory for tpu_custom_call.1']
    %8 = vsyncpa [#allocation3], 0
    %s9 = scalar_lea.sflag [#allocation3], 1
    %10 = vsyncpa %s9, 0
    loop: start=0, step=1, limit=4
    $region2: #{tpu_custom_call.1} parent=1 // loop_pre_header
      _
    $region3: #{tpu_custom_call.1} parent=1 // loop_header
      %s12 = sphi 0, %s16
      %p13 = scmp.ge.s32.totalorder %s12, 4
      %s22 = sphi 0, %s24
      %s25 = sphi 0, %s22
      %s26 = sphi 0, %s25
      %s42 = sphi 0, %s26
      %s48 = sphi 0, %s50
      %s51 = sphi 0, %s48
      %s52 = sphi 0, %s51
      %s68 = sphi 0, %s52
      %s72 = sphi 0, %s72
      %s74 = sphi 0, %s72
      %s75 = sphi 0, %s74
      %s89 = sphi 0, %s75
      %s95 = sphi 0, %s97
      %s98 = sphi 0, %s95
      %s99 = sphi 0, %s98
      %s115 = sphi 0, %s99
    $region4: #{tpu_custom_call.1} parent=1 // loop_header_branch
      %15 = sbr.rel (%p13) target = $region8
    $region5: #{tpu_custom_call.1} parent=1 // loop_body
      %s17 = ssub.s32 %s12, 1
      %s18 = ssub.s32 %s12, 2
      %s19 = sadd.s32 %s12, 1
      %s20 = ssub.s32 %s12, %s19
      %p21 = scmp.eq.s32.totalorder %s20, 0
      %s23 = sadd.s32 %s22, 1
      %s24 = scalar_select %p21, %s22, %s23
      %p27 = pneg %p21
      %p28 = scmp.eq.s32.totalorder %s12, 1
      %p29 = por %p27, %p28
      %p30 = scmp.ne.s32.totalorder %s22, %s25
      %p31 = scmp.eq.s32.totalorder %s12, 0
      %p32 = por %p30, %p31
      %p33 = scmp.ne.s32.totalorder %s22, %s25
      %p34 = scmp.eq.s32.totalorder %s17, 1
      %p35 = por %p33, %p34
      %p36 = scmp.ne.s32.totalorder %s25, %s26
      %p37 = scmp.eq.s32.totalorder %s17, 0
      %p38 = por %p36, %p37
      %p39 = scmp.ne.s32.totalorder %s25, %s26
      %p40 = scmp.eq.s32.totalorder %s18, 1
      %p41 = por %p39, %p40
      %p43 = scmp.ne.s32.totalorder %s26, %s42
      %p44 = scmp.eq.s32.totalorder %s18, 0
      %p45 = por %p43, %p44
      %s46 = ssub.s32 %s12, %s19
      %p47 = scmp.eq.s32.totalorder %s46, 0
      %s49 = sadd.s32 %s48, 1
      %s50 = scalar_select %p47, %s48, %s49
      %p53 = pneg %p47
      %p54 = scmp.eq.s32.totalorder %s12, 1
      %p55 = por %p53, %p54
      %p56 = scmp.ne.s32.totalorder %s48, %s51
      %p57 = scmp.eq.s32.totalorder %s12, 0
      %p58 = por %p56, %p57
      %p59 = scmp.ne.s32.totalorder %s48, %s51
      %p60 = scmp.eq.s32.totalorder %s17, 1
      %p61 = por %p59, %p60
      %p62 = scmp.ne.s32.totalorder %s51, %s52
      %p63 = scmp.eq.s32.totalorder %s17, 0
      %p64 = por %p62, %p63
      %p65 = scmp.ne.s32.totalorder %s51, %s52
      %p66 = scmp.eq.s32.totalorder %s18, 1
      %p67 = por %p65, %p66
      %p69 = scmp.ne.s32.totalorder %s52, %s68
      %p70 = scmp.eq.s32.totalorder %s18, 0
      %p71 = por %p69, %p70
      %s73 = sadd.s32 %s72, 1
      %p76 = scmp.eq.s32.totalorder %s12, 1
      %p77 = scmp.ne.s32.totalorder %s72, %s74
      %p78 = scmp.eq.s32.totalorder %s12, 0
      %p79 = por %p77, %p78
      %p80 = scmp.ne.s32.totalorder %s72, %s74
      %p81 = scmp.eq.s32.totalorder %s17, 1
      %p82 = por %p80, %p81
      %p83 = scmp.ne.s32.totalorder %s74, %s75
      %p84 = scmp.eq.s32.totalorder %s17, 0
      %p85 = por %p83, %p84
      %p86 = scmp.ne.s32.totalorder %s74, %s75
      %p87 = scmp.eq.s32.totalorder %s18, 1
      %p88 = por %p86, %p87
      %p90 = scmp.ne.s32.totalorder %s75, %s89
      %p91 = scmp.eq.s32.totalorder %s18, 0
      %p92 = por %p90, %p91
      %s93 = ssub.s32 %s12, %s19
      %p94 = scmp.eq.s32.totalorder %s93, 0
      %s96 = sadd.s32 %s95, 1
      %s97 = scalar_select %p94, %s95, %s96
      %p100 = pneg %p94
      %p101 = scmp.eq.s32.totalorder %s12, 1
      %p102 = por %p100, %p101
      %p103 = scmp.ne.s32.totalorder %s95, %s98
      %p104 = scmp.eq.s32.totalorder %s12, 0
      %p105 = por %p103, %p104
      %p106 = scmp.ne.s32.totalorder %s95, %s98
      %p107 = scmp.eq.s32.totalorder %s17, 1
      %p108 = por %p106, %p107
      %p109 = scmp.ne.s32.totalorder %s98, %s99
      %p110 = scmp.eq.s32.totalorder %s17, 0
      %p111 = por %p109, %p110
      %p112 = scmp.ne.s32.totalorder %s98, %s99
      %p113 = scmp.eq.s32.totalorder %s18, 1
      %p114 = por %p112, %p113
      %p116 = scmp.ne.s32.totalorder %s99, %s115
      %p117 = scmp.eq.s32.totalorder %s18, 0
      %p118 = por %p116, %p117
      %p119 = scmp.le.s32.totalorder 1, %s12
      %p120 = scmp.lt.s32.totalorder %s12, 3
      %p121 = pnand %p119, %p120
      %p122 = pneg %p121
      // Predicated region
      $region9: #{tpu_custom_call.1} parent=5 // pred_check
        _
      $region10: #{tpu_custom_call.1} parent=5 // pred_check_branch
        %124 = sbr.rel (%p121) target = $region12
      $region11: #{tpu_custom_call.1} parent=5 // pred_region
        %s125 = ssub.s32 %s12, 1
        // Predicated region
        $region13: #{tpu_custom_call.1} parent=11 // pred_check
          %p126 = pneg %p85
        $region14: #{tpu_custom_call.1} parent=11 // pred_check_branch
          %128 = sbr.rel (%p126) target = $region16
        $region15: #{tpu_custom_call.1} parent=11 // pred_region
          _
        $region16: #{tpu_custom_call.1} parent=11 // pred_fallthru
          _
      $region12: #{tpu_custom_call.1} parent=5 // pred_fallthru
        _
      %p129 = scmp.lt.s32.totalorder %s12, 2
      // Predicated region
      $region17: #{tpu_custom_call.1} parent=5 // pred_check
        %p130 = pneg %p129
      $region18: #{tpu_custom_call.1} parent=5 // pred_check_branch
        %132 = sbr.rel (%p130) target = $region20
      $region19: #{tpu_custom_call.1} parent=5 // pred_region
        // Predicated region
        $region21: #{tpu_custom_call.1} parent=19 // pred_check
          %p133 = pneg %p32
        $region22: #{tpu_custom_call.1} parent=19 // pred_check_branch
          %135 = sbr.rel (%p133) target = $region24
        $region23: #{tpu_custom_call.1} parent=19 // pred_region
          %p136 = scmp.lt.s32.totalorder %s12, 1
          %s137 = scalar_select %p136, %s12, 1
          %s138 = smul.addr %s137, 8
          %s139 = scalar_lea.vmem %s0, %s138
        $region24: #{tpu_custom_call.1} parent=19 // pred_fallthru
          _
        // Predicated region
        $region25: #{tpu_custom_call.1} parent=19 // pred_check
          %p140 = pneg %p58
        $region26: #{tpu_custom_call.1} parent=19 // pred_check_branch
          %142 = sbr.rel (%p140) target = $region28
        $region27: #{tpu_custom_call.1} parent=19 // pred_region
          %p143 = scmp.lt.s32.totalorder %s12, 1
          %s144 = scalar_select %p143, %s12, 1
          %s145 = smul.addr %s144, 8
          %s146 = scalar_lea.vmem %s1, %s145
        $region28: #{tpu_custom_call.1} parent=19 // pred_fallthru
          _
      $region20: #{tpu_custom_call.1} parent=5 // pred_fallthru
        _
      %p147 = scmp.le.s32.totalorder 1, %s12
      %p148 = scmp.lt.s32.totalorder %s12, 3
      %p149 = pnand %p147, %p148
      %p150 = pneg %p149
      // Predicated region
      $region29: #{tpu_custom_call.1} parent=5 // pred_check
        _
      $region30: #{tpu_custom_call.1} parent=5 // pred_check_branch
        %152 = sbr.rel (%p149) target = $region32
      $region31: #{tpu_custom_call.1} parent=5 // pred_region
        %s153 = ssub.s32 %s12, 1
        %p154 = scmp.lt.s32.totalorder %s17, 1
        %s155 = scalar_select %p154, %s17, 1
        %s156 = smul.addr %s155, 8
        %s157 = scalar_lea.vmem %s0, %s156
        %p158 = pneg %p38
        %p159 = pneg %p35
        %p160 = scmp.lt.s32.totalorder %s17, 1
        %s161 = scalar_select %p160, %s17, 1
        %s162 = smul.addr %s161, 8
        %s163 = scalar_lea.vmem %s1, %s162
        %p164 = pneg %p64
        %p165 = pneg %p61
        %p166 = pneg %p85
        %p167 = pneg %p82
        %p168 = pneg %p111
        %p169 = pneg %p108
        %s170 = sand.u32 %s98, 1
        %s171 = scalar_lea.sflag [#allocation3], %s170
        %s172 = sand.u32 %s98, 1
        %s173 = smul.addr %s172, 8
        %s174 = scalar_lea.vmem [#allocation2], %s173
        %p175 = scmp.lt.s32.totalorder %s17, 1
        %s176 = scalar_select %p175, %s17, 1
        %s177 = smul.addr %s176, 8
        %s178 = scalar_lea.vmem %s0, %s177
        %p179 = scmp.lt.s32.totalorder %s17, 1
        %s180 = scalar_select %p179, %s17, 1
        %s181 = smul.addr %s180, 8
        %s182 = scalar_lea.vmem %s1, %s181
        %v183 = vld [vmem:[%s2] sm:$0xff]
        %v184 = vld [vmem:[%s2 + $0x8] sm:$0xff]
        %v185 = vld [vmem:[%s2 + $0x10] sm:$0xff]
        %v186 = vld [vmem:[%s2 + $0x18] sm:$0xff]
        %v187 = vld [vmem:[%s2 + $0x20] sm:$0xff]
        %v188 = vld [vmem:[%s2 + $0x28] sm:$0xff]
        %v189 = vld [vmem:[%s2 + $0x30] sm:$0xff]
        %v190 = vld [vmem:[%s2 + $0x38] sm:$0xff]
        %v191 = vld [vmem:[%s2 + $0x40] sm:$0xff]
        %v192 = vld [vmem:[%s2 + $0x48] sm:$0xff]
        %v193 = vld [vmem:[%s2 + $0x50] sm:$0xff]
        %v194 = vld [vmem:[%s2 + $0x58] sm:$0xff]
        %v195 = vld [vmem:[%s2 + $0x60] sm:$0xff]
        %v196 = vld [vmem:[%s2 + $0x68] sm:$0xff]
        %v197 = vld [vmem:[%s2 + $0x70] sm:$0xff]
        %v198 = vld [vmem:[%s2 + $0x78] sm:$0xff]
        %v199 = vld [vmem:[%s2 + $0x80] sm:$0xff]
        %v200 = vld [vmem:[%s2 + $0x88] sm:$0xf]
        %v201 = vlaneseq
        %v202 = vand.u32 %v201, 127
        %v203 = vld [vmem:[%s178] sm:$0xff]
        %v205 = vrot.slane %v203, 7
        %vm207 = vcmask 1040384
        %v208 = vsel %vm207, %v205, %v205
        %v209 = vrot.slane %v203, 1
        %vm211 = vcmask 1046528
        %v212 = vsel %vm211, %v209, %v209
        %v213 = vld [vmem:[%s182] sm:$0xff]
        %214 = vset.pattern.permute.xlu0 3
        %215 = vperm.xlu0 %214, %v213
        %v216 = vpop.permute.xlu0 %215
        %vm217 = vcmp.eq.s32.totalorder %v202, %v216
        %v218 = vadd.s32 %v213, 24
        %219 = vset.pattern.permute.xlu0 2
        %220 = vperm.xlu0 %219, %v218
        %v221 = vpop.permute.xlu0 %220
        %vm222 = vcmp.eq.s32.totalorder %v202, %v221
        %vm223 = vmor %vm217, %vm222
        %v224 = vadd.s32 %v213, 31
        %225 = vset.pattern.permute.xlu0 1
        %226 = vperm.xlu0 %225, %v224
        %v227 = vpop.permute.xlu0 %226
        %vm228 = vcmp.eq.s32.totalorder %v202, %v227
        %vm229 = vmor %vm223, %vm228
        %v230 = vadd.s32 %v213, 63
        %231 = vset.pattern.permute.xlu0 0
        %232 = vperm.xlu0 %231, %v230
        %v233 = vpop.permute.xlu0 %232
        %vm234 = vcmp.eq.s32.totalorder %v202, %v233
        %vm235 = vmor %vm229, %vm234
        %v236 = vsel %vm235, 1, 0
        %v237 = vcvt.s32.f32 %v236
        %238 = vrot.lane.b32.xlu0 %v203, 4
        %v239 = vpop.permute.xlu0 %238
        %242 = vrot.lane.b32.xlu0 %v212, 8
        %v243 = vpop.permute.xlu0 %242
        %246 = vrot.lane.b32.xlu0 %v237, 12
        %v247 = vpop.permute.xlu0 %246
        %vm249 = vcmask 31744
        %v250 = vsel %vm249, %v208, %v239
        %vm251 = vcmask 64512
        %v252 = vsel %vm251, %v250, %v243
        %vm253 = vcmask 97280
        %v254 = vsel %vm253, %v252, %v247
        %v255 = vsel %vm253, %v247, 0
        %vm257 = vcmask 1043456
        %v259 = vsel %vm257, %v200, 0
        %261 = vmatprep.subr.mxu0 0.0
        %262 = vmatpush1.msra.mxu0 %v183
        %263 = vmatprep.subr.mxu0 0.0
        %264 = vmatpush1.msra.mxu0 %v184
        %265 = vmatprep.subr.mxu0 0.0
        %266 = vmatpush1.msra.mxu0 %v185
        %267 = vmatprep.subr.mxu0 0.0
        %268 = vmatpush1.msra.mxu0 %v186
        %269 = vmatprep.subr.mxu0 0.0
        %270 = vmatpush1.msra.mxu0 %v187
        %271 = vmatprep.subr.mxu0 0.0
        %272 = vmatpush1.msra.mxu0 %v188
        %273 = vmatprep.subr.mxu0 0.0
        %274 = vmatpush1.msra.mxu0 %v189
        %275 = vmatprep.subr.mxu0 0.0
        %276 = vmatpush1.msra.mxu0 %v190
        %277 = vmatprep.subr.mxu0 0.0
        %278 = vmatpush1.msra.mxu0 %v191
        %279 = vmatprep.subr.mxu0 0.0
        %280 = vmatpush1.msra.mxu0 %v192
        %281 = vmatprep.subr.mxu0 0.0
        %282 = vmatpush1.msra.mxu0 %v193
        %283 = vmatprep.subr.mxu0 0.0
        %284 = vmatpush1.msra.mxu0 %v194
        %285 = vmatprep.subr.mxu0 0.0
        %286 = vmatpush1.msra.mxu0 %v195
        %287 = vmatprep.subr.mxu0 0.0
        %288 = vmatpush1.msra.mxu0 %v196
        %289 = vmatprep.subr.mxu0 0.0
        %290 = vmatpush1.msra.mxu0 %v197
        %291 = vmatprep.subr.mxu0 0.0
        %292 = vmatpush1.msra.mxu0 %v198
        %293 = vmatprep.subr.mxu0 0.0
        %294 = vmatpush1.msra.mxu0 %v199
        %295 = vmatprep.subr.mxu0 0.0
        %296 = vmatpush1.msra.mxu0 %v259
        %297 = vmatprep.subr.mxu0 0.0
        %298 = vmatpush1.msra.mxu0 0.0
        %299 = vmatprep.subr.mxu0 0.0
        %300 = vmatpush1.msra.mxu0 0.0
        %301 = vmatprep.subr.mxu0 0.0
        %302 = vmatpush1.msra.mxu0 0.0
        %303 = vmatprep.subr.mxu0 0.0
        %304 = vmatpush1.msra.mxu0 0.0
        %305 = vmatprep.subr.mxu0 0.0
        %306 = vmatpush1.msra.mxu0 0.0
        %307 = vmatprep.subr.mxu0 0.0
        %308 = vmatpush1.msra.mxu0 0.0
        %309 = vmatprep.subr.mxu0 0.0
        %310 = vmatpush1.msra.mxu0 0.0
        %311 = vmatprep.subr.mxu0 0.0
        %312 = vmatpush1.msra.mxu0 0.0
        %313 = vmatprep.subr.mxu0 0.0
        %314 = vmatpush1.msra.mxu0 0.0
        %315 = vmatprep.subr.mxu0 0.0
        %316 = vmatpush1.msra.mxu0 0.0
        %317 = vmatprep.subr.mxu0 0.0
        %318 = vmatpush1.msra.mxu0 0.0
        %319 = vmatprep.subr.mxu0 0.0
        %320 = vmatpush1.msra.mxu0 0.0
        %321 = vmatprep.subr.mxu0 0.0
        %322 = vmatpush1.msra.mxu0 0.0
        %323 = vmatprep.subr.mxu0 0.0
        %324 = vmatpush1.msra.mxu0 0.0
        %325 = vmatprep.mubr.f32.mxu0 %v255
        %326 = vmatmul.mubr.f32.gmra.mrb[0].mxu0 %v254
        %v327 = vpop.f32.mrb[0].mxu0
        %v328 = vadd.f32 0.0, %v327
        %v329 = vpop.f32.mrb[0].mxu0
        %330 = vdwg.mxu0
        %vm331 = vcmask 261120
        %332 = vst.msk [vmem:[%s174] sm:$0xff] %vm331, %v328
        %s333 = sand.u32 %s98, 1
        %s334 = scalar_lea.sflag [#allocation3], %s333
        %s335 = sand.u32 %s98, 1
        %s336 = smul.addr %s335, 8
        %s337 = scalar_lea.vmem [#allocation2], %s336
        // Predicated region
        $region33: #{tpu_custom_call.1} parent=31 // pred_check
          %p338 = pneg %p108
        $region34: #{tpu_custom_call.1} parent=31 // pred_check_branch
          %340 = sbr.rel (%p338) target = $region36
        $region35: #{tpu_custom_call.1} parent=31 // pred_region
          %s342 = ssub.s32 128, 128
          %343 = vsyncadd %s334, %s342
          %s344 = smul.addr %s17, 128
          %s345 = scalar_lea.hbm %s3, %s344
          %s347 = sshll.u32 %s337, 4
          %s348 = int_to_ptr.vmem [resolvable:$true] %s347
          %350 = dma.vmem_to_hbm [thread:$0]  %s348, 128, %s345, %s334
        $region36: #{tpu_custom_call.1} parent=31 // pred_fallthru
          _
      $region32: #{tpu_custom_call.1} parent=5 // pred_fallthru
        _
      %p351 = scmp.le.s32.totalorder 2, %s12
      // Predicated region
      $region37: #{tpu_custom_call.1} parent=5 // pred_check
        %p352 = pneg %p351
      $region38: #{tpu_custom_call.1} parent=5 // pred_check_branch
        %354 = sbr.rel (%p352) target = $region40
      $region39: #{tpu_custom_call.1} parent=5 // pred_region
        %s355 = ssub.s32 %s12, 2
        // Predicated region
        $region41: #{tpu_custom_call.1} parent=39 // pred_check
          %p356 = pneg %p114
        $region42: #{tpu_custom_call.1} parent=39 // pred_check_branch
          %358 = sbr.rel (%p356) target = $region44
        $region43: #{tpu_custom_call.1} parent=39 // pred_region
          %s359 = sand.u32 %s99, 1
          %s360 = scalar_lea.sflag [#allocation3], %s359
          %s361 = sand.u32 %s99, 1
          %s362 = smul.addr %s361, 8
          %s363 = scalar_lea.vmem [#allocation2], %s362
          %364 = dma.done %s360, 128
        $region44: #{tpu_custom_call.1} parent=39 // pred_fallthru
          _
      $region40: #{tpu_custom_call.1} parent=5 // pred_fallthru
        _
    $region6: #{tpu_custom_call.1} parent=1 // loop_footer
      %s16 = sadd.s32 1, %s12
    $region7: #{tpu_custom_call.1} parent=1 // loop_footer_branch
      %11 = sbr.rel target = $region3
    $region8: #{tpu_custom_call.1} parent=1 // loop_exit
      _
    %365 = vsyncpa [#allocation3], 1
    %s366 = scalar_lea.sflag [#allocation3], 1
    %367 = vsyncpa %s366, 1

</llo_original>
